<compile_context>
chip_gen: v5e
topology: v5e:2x2
jax: 0.10.0
libtpu: 0.0.40
codegen_flags: <defaults>
</compile_context>

<pallas_src>
import functools

import jax
import jax.numpy as jnp
from jax.experimental import pallas as pl
from jax.experimental.pallas import tpu as pltpu


def _round_up(x, m):
    return (x + m - 1) // m * m


def _mlp_kernel(x_ref, w_ref, b_ref, o_ref, *, kp, l):
    # x_ref: (TB, Kp) bf16   w_ref: (Kp + 2L, L) bf16   b_ref: (8, L) f32
    x = x_ref[...]

    # Static, (8,128)-aligned slices of the packed, VMEM-resident weight slab.
    w1 = w_ref[0:kp, :]                 # (Kp, L)
    w2 = w_ref[kp:kp + l, :]            # (L,  L)
    w3 = w_ref[kp + l:kp + 2 * l, :]    # (L,  L)

    b1 = b_ref[0:1, :]                  # (1, L) f32
    b2 = b_ref[1:2, :]
    b3 = b_ref[2:3, :]

    # Layer 1: bf16 MXU matmul, f32 accumulate, f32 bias + ReLU (VPU).
    h1 = jnp.dot(x, w1, preferred_element_type=jnp.float32) + b1
    h1 = jnp.maximum(h1, 0.0)
    # Layer 2
    h2 = jnp.dot(h1.astype(jnp.bfloat16), w2, preferred_element_type=jnp.float32) + b2
    h2 = jnp.maximum(h2, 0.0)
    # Layer 3 (no activation)
    out = jnp.dot(h2.astype(jnp.bfloat16), w3, preferred_element_type=jnp.float32) + b3

    o_ref[...] = out.astype(o_ref.dtype)


def state_predictor_forward(x, params):
    """x: (B, input_size) f32. params: W1,b1,W2,b2,W3,b3 with W stored (in, out)."""
    w1, b1 = params["W1"], params["b1"]
    w2, b2 = params["W2"], params["b2"]
    w3, b3 = params["W3"], params["b3"]

    B, in_size = x.shape
    hid = w1.shape[1]
    out_size = w3.shape[1]

    # Lane-dense padded feature widths (multiples of 128).
    kp = _round_up(max(in_size, 1), 128)          # contraction dim of layer 1
    l = _round_up(max(hid, out_size, 1), 128)     # common lane width for hidden/output

    # Batch tile: multiple of 16 (bf16 sublane pack) big enough to amortize the
    # ~0.35us per-step overhead; capped so x/out tiles stay small in VMEM.
    tb = min(512, _round_up(B, 16))
    bp = _round_up(B, tb)

    # --- pad + cast (wrapper-side, HBM) -------------------------------------
    xp = jnp.zeros((bp, kp), jnp.bfloat16).at[:B, :in_size].set(x.astype(jnp.bfloat16))

    w1p = jnp.zeros((kp, l), jnp.bfloat16).at[:in_size, :hid].set(w1.astype(jnp.bfloat16))
    w2p = jnp.zeros((l, l), jnp.bfloat16).at[:hid, :hid].set(w2.astype(jnp.bfloat16))
    w3p = jnp.zeros((l, l), jnp.bfloat16).at[:hid, :out_size].set(w3.astype(jnp.bfloat16))
    wp = jnp.concatenate([w1p, w2p, w3p], axis=0)             # (Kp + 2L, L) bf16

    bpk = jnp.zeros((8, l), jnp.float32)
    bpk = bpk.at[0, :hid].set(b1.reshape(-1).astype(jnp.float32))
    bpk = bpk.at[1, :hid].set(b2.reshape(-1).astype(jnp.float32))
    bpk = bpk.at[2, :out_size].set(b3.reshape(-1).astype(jnp.float32))

    kernel = functools.partial(_mlp_kernel, kp=kp, l=l)

    out_padded = pl.pallas_call(
        kernel,
        out_shape=jax.ShapeDtypeStruct((bp, l), jnp.float32),
        grid=(bp // tb,),
        in_specs=[
            pl.BlockSpec((tb, kp), lambda i: (i, 0)),           # x: tiled along batch
            pl.BlockSpec((kp + 2 * l, l), lambda i: (0, 0)),    # packed weights: resident
            pl.BlockSpec((8, l), lambda i: (0, 0)),             # packed biases: resident
        ],
        out_specs=pl.BlockSpec((tb, l), lambda i: (i, 0)),      # lane-dense output tile
        compiler_params=pltpu.CompilerParams(
            dimension_semantics=("parallel",),                  # shard batch across TCs
        ),
    )(xp, wp, bpk)

    return out_padded[:B, :out_size]


def init_params(key, input_size, hidden_size, output_size):
    """Mimics torch.nn.Linear default init: U[-1/sqrt(fan_in), +1/sqrt(fan_in)].
    Weights stored as (in_features, out_features)."""
    ks = jax.random.split(key, 6)

    def lin(kw, kb, fan_in, fan_out):
        bound = 1.0 / jnp.sqrt(jnp.float32(fan_in))
        w = jax.random.uniform(kw, (fan_in, fan_out), jnp.float32, -bound, bound)
        b = jax.random.uniform(kb, (1, fan_out), jnp.float32, -bound, bound)
        return w, b

    w1, b1 = lin(ks[0], ks[1], input_size, hidden_size)
    w2, b2 = lin(ks[2], ks[3], hidden_size, hidden_size)
    w3, b3 = lin(ks[4], ks[5], hidden_size, output_size)
    return {"W1": w1, "b1": b1, "W2": w2, "b2": b2, "W3": w3, "b3": b3}


def reference_forward(x, p):
    h1 = jnp.maximum(x @ p["W1"] + p["b1"], 0.0)
    h2 = jnp.maximum(h1 @ p["W2"] + p["b2"], 0.0)
    return h2 @ p["W3"] + p["b3"]


if __name__ == "__main__":
    # Small shapes consistent with the module: batch=8, input=16, hidden=32, output=8
    B, input_size, hidden_size, output_size = 8, 16, 32, 8

    key = jax.random.PRNGKey(0)
    k_x, k_p = jax.random.split(key)
    x = jax.random.normal(k_x, (B, input_size), dtype=jnp.float32)
    params = init_params(k_p, input_size, hidden_size, output_size)

    fwd = jax.jit(state_predictor_forward)
    out = fwd(x, params)
    out = jax.block_until_ready(out)

    ref = reference_forward(x, params)
    assert out.shape == (B, output_size)
    # bf16 MXU inputs (f32 accumulation) -> relaxed tolerance vs the f32 reference.
    assert jnp.allclose(out, ref, atol=3e-2, rtol=3e-2), float(jnp.max(jnp.abs(out - ref)))

    print("KERNEL_OK")
</pallas_src>

<mosaic_0001>
module attributes {stable_mosaic.version = 11 : i64} {
  func.func @_mlp_kernel(%arg0: i32, %arg1: memref<16x128xbf16, #tpu.memory_space<vmem>>, %arg2: memref<384x128xbf16, #tpu.memory_space<vmem>>, %arg3: memref<8x128xf32, #tpu.memory_space<vmem>>, %arg4: memref<16x128xf32, #tpu.memory_space<vmem>>) attributes {dimension_semantics = [#tpu.dimension_semantics<parallel>], iteration_bounds = array<i64: 1>, scalar_prefetch = 0 : i64, scratch_operands = 0 : i64, tpu.core_type = #tpu.core_type<tc>, window_params = [{transform_indices = @transform_0, window_bounds = array<i64: 16, 128>}, {pipeline_mode = #tpu.pipeline_mode<synchronous>, transform_indices = @transform_1, window_bounds = array<i64: 384, 128>}, {pipeline_mode = #tpu.pipeline_mode<synchronous>, transform_indices = @transform_2, window_bounds = array<i64: 8, 128>}, {transform_indices = @transform_3, window_bounds = array<i64: 16, 128>}]} {
    %c0 = arith.constant 0 : index
    %c0_0 = arith.constant 0 : index
    %0 = vector.load %arg1[%c0, %c0_0] : memref<16x128xbf16, #tpu.memory_space<vmem>>, vector<16x128xbf16>
    %c0_1 = arith.constant 0 : index
    %c0_2 = arith.constant 0 : index
    %1 = vector.load %arg2[%c0_1, %c0_2] : memref<384x128xbf16, #tpu.memory_space<vmem>>, vector<128x128xbf16>
    %c128 = arith.constant 128 : index
    %c0_3 = arith.constant 0 : index
    %2 = vector.load %arg2[%c128, %c0_3] : memref<384x128xbf16, #tpu.memory_space<vmem>>, vector<128x128xbf16>
    %c256 = arith.constant 256 : index
    %c0_4 = arith.constant 0 : index
    %3 = vector.load %arg2[%c256, %c0_4] : memref<384x128xbf16, #tpu.memory_space<vmem>>, vector<128x128xbf16>
    %c0_5 = arith.constant 0 : index
    %c0_6 = arith.constant 0 : index
    %4 = vector.load %arg3[%c0_5, %c0_6] : memref<8x128xf32, #tpu.memory_space<vmem>>, vector<1x128xf32>
    %c1 = arith.constant 1 : index
    %c0_7 = arith.constant 0 : index
    %5 = vector.load %arg3[%c1, %c0_7] : memref<8x128xf32, #tpu.memory_space<vmem>>, vector<1x128xf32>
    %c2 = arith.constant 2 : index
    %c0_8 = arith.constant 0 : index
    %6 = vector.load %arg3[%c2, %c0_8] : memref<8x128xf32, #tpu.memory_space<vmem>>, vector<1x128xf32>
    %cst = arith.constant dense<0.000000e+00> : vector<16x128xf32>
    %7 = tpu.matmul %0, %1, %cst {dimension_numbers = #tpu.dot_dimension_numbers<[1], [0], [0], [1], [0, 0, 1, 1], [], []>} : vector<16x128xbf16>, vector<128x128xbf16>, vector<16x128xf32> -> vector<16x128xf32>
    %8 = vector.broadcast %4 : vector<1x128xf32> to vector<16x128xf32>
    %9 = arith.addf %7, %8 : vector<16x128xf32>
    %cst_9 = arith.constant 0.000000e+00 : f32
    %10 = vector.broadcast %cst_9 : f32 to vector<16x128xf32>
    %11 = arith.maximumf %9, %10 : vector<16x128xf32>
    %12 = arith.truncf %11 : vector<16x128xf32> to vector<16x128xbf16>
    %cst_10 = arith.constant dense<0.000000e+00> : vector<16x128xf32>
    %13 = tpu.matmul %12, %2, %cst_10 {dimension_numbers = #tpu.dot_dimension_numbers<[1], [0], [0], [1], [0, 0, 1, 1], [], []>} : vector<16x128xbf16>, vector<128x128xbf16>, vector<16x128xf32> -> vector<16x128xf32>
    %14 = vector.broadcast %5 : vector<1x128xf32> to vector<16x128xf32>
    %15 = arith.addf %13, %14 : vector<16x128xf32>
    %cst_11 = arith.constant 0.000000e+00 : f32
    %16 = vector.broadcast %cst_11 : f32 to vector<16x128xf32>
    %17 = arith.maximumf %15, %16 : vector<16x128xf32>
    %18 = arith.truncf %17 : vector<16x128xf32> to vector<16x128xbf16>
    %cst_12 = arith.constant dense<0.000000e+00> : vector<16x128xf32>
    %19 = tpu.matmul %18, %3, %cst_12 {dimension_numbers = #tpu.dot_dimension_numbers<[1], [0], [0], [1], [0, 0, 1, 1], [], []>} : vector<16x128xbf16>, vector<128x128xbf16>, vector<16x128xf32> -> vector<16x128xf32>
    %20 = vector.broadcast %6 : vector<1x128xf32> to vector<16x128xf32>
    %21 = arith.addf %19, %20 : vector<16x128xf32>
    %c0_13 = arith.constant 0 : index
    %c0_14 = arith.constant 0 : index
    %22 = vector.load %arg4[%c0_13, %c0_14] : memref<16x128xf32, #tpu.memory_space<vmem>>, vector<16x128xf32>
    tpu.vector_store %arg4[%c0_13, %c0_14], %21 {strides = array<i32>} : memref<16x128xf32, #tpu.memory_space<vmem>>, vector<16x128xf32>,
    return
  }
  func.func @transform_0(%arg0: i32) -> (i32, i32) {
    %c0_i32 = arith.constant 0 : i32
    %c0_i32_0 = arith.constant 0 : i32
    return %arg0, %c0_i32 : i32, i32
  }
  func.func @transform_1(%arg0: i32) -> (i32, i32) {
    %c0_i32 = arith.constant 0 : i32
    %c0_i32_0 = arith.constant 0 : i32
    %c0_i32_1 = arith.constant 0 : i32
    return %c0_i32, %c0_i32_0 : i32, i32
  }
  func.func @transform_2(%arg0: i32) -> (i32, i32) {
    %c0_i32 = arith.constant 0 : i32
    %c0_i32_0 = arith.constant 0 : i32
    %c0_i32_1 = arith.constant 0 : i32
    return %c0_i32, %c0_i32_0 : i32, i32
  }
  func.func @transform_3(%arg0: i32) -> (i32, i32) {
    %c0_i32 = arith.constant 0 : i32
    %c0_i32_0 = arith.constant 0 : i32
    return %arg0, %c0_i32 : i32, i32
  }
}

</mosaic_0001>

<llo_original>
// kernel: state_predictor_forward.1
$region0: #{state_predictor_forward.1}
  #allocation0 [shape = 'u32[]', space=smem, size = 0x4, offset = 0x4, fixed_abs, tag = 'smem constant byte address 0x4 - core index']
  #allocation1 [shape = 'u32[72,128]{1,0:T(1,128)}', space=vmem, size = 0x9000, scoped, tag = 'internal scratch']
  %s0 = inlined_call_operand.vmem [shape: bf16[16,128], index: 0, kind: input, shape index: {}]
  %s1 = inlined_call_operand.vmem [shape: bf16[384,128], index: 1, kind: input, shape index: {}]
  %s2 = inlined_call_operand.vmem [shape: f32[8,128], index: 2, kind: input, shape index: {}]
  %s3 = inlined_call_operand.vmem [shape: f32[16,128], index: 3, kind: output, shape index: {}]
  %s4 = sld [smem:[#allocation0]]
  $region22: #{state_predictor_forward.1} parent=0
    _
  %s6 = ssub.s32 1, %s4
  %s7 = scalar_select 0, %s6, %s4
  // Predicated region
  $region2: #{state_predictor_forward.1} parent=0 // pred_check
    _
  $region3: #{state_predictor_forward.1} parent=0 // pred_check_branch
    %9 = sbr.rel (0) target = $region5
  $region4: #{state_predictor_forward.1} parent=0 // pred_region
    _
  $region5: #{state_predictor_forward.1} parent=0 // pred_fallthru
    _
  // Predicated region
  $region6: #{state_predictor_forward.1} parent=0 // pred_check
    _
  $region7: #{state_predictor_forward.1} parent=0 // pred_check_branch
    %11 = sbr.rel (0) target = $region9
  $region8: #{state_predictor_forward.1} parent=0 // pred_region
    _
  $region9: #{state_predictor_forward.1} parent=0 // pred_fallthru
    _
  // Predicated region
  $region10: #{state_predictor_forward.1} parent=0 // pred_check
    _
  $region11: #{state_predictor_forward.1} parent=0 // pred_check_branch
    %13 = sbr.rel (0) target = $region13
  $region12: #{state_predictor_forward.1} parent=0 // pred_region
    _
  $region13: #{state_predictor_forward.1} parent=0 // pred_fallthru
    _
  %v14 = vld [vmem:[%s0] sm:$0xf]
  %v15 = vld [vmem:[%s0 + $0x4] sm:$0xf]
  %v16 = vld [vmem:[%s1] sm:$0xf]
  %v17 = vld [vmem:[%s1 + $0x4] sm:$0xf]
  %v18 = vld [vmem:[%s1 + $0x8] sm:$0xf]
  %v19 = vld [vmem:[%s1 + $0xc] sm:$0xf]
  %v20 = vld [vmem:[%s1 + $0x10] sm:$0xf]
  %v21 = vld [vmem:[%s1 + $0x14] sm:$0xf]
  %v22 = vld [vmem:[%s1 + $0x18] sm:$0xf]
  %v23 = vld [vmem:[%s1 + $0x1c] sm:$0xf]
  %v24 = vld [vmem:[%s1 + $0x20] sm:$0xf]
  %v25 = vld [vmem:[%s1 + $0x24] sm:$0xf]
  %v26 = vld [vmem:[%s1 + $0x28] sm:$0xf]
  %v27 = vld [vmem:[%s1 + $0x2c] sm:$0xf]
  %v28 = vld [vmem:[%s1 + $0x30] sm:$0xf]
  %v29 = vld [vmem:[%s1 + $0x34] sm:$0xf]
  %v30 = vld [vmem:[%s1 + $0x38] sm:$0xf]
  %v31 = vld [vmem:[%s1 + $0x3c] sm:$0xf]
  %v32 = vld [vmem:[%s1 + $0x40] sm:$0xf]
  %v33 = vld [vmem:[%s1 + $0x44] sm:$0xf]
  %v34 = vld [vmem:[%s1 + $0x48] sm:$0xf]
  %v35 = vld [vmem:[%s1 + $0x4c] sm:$0xf]
  %v36 = vld [vmem:[%s1 + $0x50] sm:$0xf]
  %v37 = vld [vmem:[%s1 + $0x54] sm:$0xf]
  %v38 = vld [vmem:[%s1 + $0x58] sm:$0xf]
  %v39 = vld [vmem:[%s1 + $0x5c] sm:$0xf]
  %v40 = vld [vmem:[%s1 + $0x60] sm:$0xf]
  %v41 = vld [vmem:[%s1 + $0x64] sm:$0xf]
  %v42 = vld [vmem:[%s1 + $0x68] sm:$0xf]
  %v43 = vld [vmem:[%s1 + $0x6c] sm:$0xf]
  %v44 = vld [vmem:[%s1 + $0x70] sm:$0xf]
  %v45 = vld [vmem:[%s1 + $0x74] sm:$0xf]
  %v46 = vld [vmem:[%s1 + $0x78] sm:$0xf]
  %v47 = vld [vmem:[%s1 + $0x7c] sm:$0xf]
  %v48 = vld [vmem:[%s1 + $0x80] sm:$0xf]
  %v49 = vld [vmem:[%s1 + $0x84] sm:$0xf]
  %v50 = vld [vmem:[%s1 + $0x88] sm:$0xf]
  %v51 = vld [vmem:[%s1 + $0x8c] sm:$0xf]
  %v52 = vld [vmem:[%s1 + $0x90] sm:$0xf]
  %v53 = vld [vmem:[%s1 + $0x94] sm:$0xf]
  %v54 = vld [vmem:[%s1 + $0x98] sm:$0xf]
  %v55 = vld [vmem:[%s1 + $0x9c] sm:$0xf]
  %v56 = vld [vmem:[%s1 + $0xa0] sm:$0xf]
  %v57 = vld [vmem:[%s1 + $0xa4] sm:$0xf]
  %v58 = vld [vmem:[%s1 + $0xa8] sm:$0xf]
  %v59 = vld [vmem:[%s1 + $0xac] sm:$0xf]
  %v60 = vld [vmem:[%s1 + $0xb0] sm:$0xf]
  %v61 = vld [vmem:[%s1 + $0xb4] sm:$0xf]
  %v62 = vld [vmem:[%s1 + $0xb8] sm:$0xf]
  %v63 = vld [vmem:[%s1 + $0xbc] sm:$0xf]
  %v64 = vld [vmem:[%s2] sm:$0x1]
  %v65 = vld [vmem:[%s2 + $0x1] sm:$0x1]
  %v66 = vld [vmem:[%s2 + $0x2] sm:$0x1]
  %v67 = vperm.slane %v64, 0
  %v70 = vunpack.c.l.b16 %v14
  %v71 = vunpack.c.l.b16 %v15
  %v72 = vpack.c.b16 %v71, %v70
  %v90 = vunpack.c.l.b16 %v16
  %v91 = vunpack.c.l.b16 %v17
  %v92 = vunpack.c.l.b16 %v18
  %v93 = vunpack.c.l.b16 %v19
  %v94 = vunpack.c.l.b16 %v20
  %v95 = vunpack.c.l.b16 %v21
  %v96 = vunpack.c.l.b16 %v22
  %v97 = vunpack.c.l.b16 %v23
  %v98 = vunpack.c.l.b16 %v24
  %v99 = vunpack.c.l.b16 %v25
  %v100 = vunpack.c.l.b16 %v26
  %v101 = vunpack.c.l.b16 %v27
  %v102 = vunpack.c.l.b16 %v28
  %v103 = vunpack.c.l.b16 %v29
  %v104 = vunpack.c.l.b16 %v30
  %v105 = vunpack.c.l.b16 %v31
  %v106 = vpack.c.b16 %v91, %v90
  %v107 = vpack.c.b16 %v93, %v92
  %v108 = vpack.c.b16 %v95, %v94
  %v109 = vpack.c.b16 %v97, %v96
  %v110 = vpack.c.b16 %v99, %v98
  %v111 = vpack.c.b16 %v101, %v100
  %v112 = vpack.c.b16 %v103, %v102
  %v113 = vpack.c.b16 %v105, %v104
  %122 = vmatpush.bf16.msra.mxu0 %v113
  %123 = vmatpush.bf16.msra.mxu0 %v112
  %124 = vmatpush.bf16.msra.mxu0 %v111
  %125 = vmatpush.bf16.msra.mxu0 %v110
  %126 = vmatpush.bf16.msra.mxu0 %v109
  %127 = vmatpush.bf16.msra.mxu0 %v108
  %128 = vmatpush.bf16.msra.mxu0 %v107
  %129 = vmatpush.bf16.msra.mxu0 %v106
  %130 = vmatmul.bf16.gmra.mxu0 %v72
  %v131 = vpop.f32.mrf.mxu0
  %v132 = vadd.f32 %v67, %v131
  %v133 = vpop.f32.mrf.mxu0
  %v134 = vadd.f32 %v67, %v133
  %135 = vdwg.mxu0
  %v136 = vmax.f32 %v132, 0.0
  %v137 = vmax.f32 %v134, 0.0
  %v138 = vpack.c.bf16 %v137, %v136
  %v139 = vperm.slane %v65, 0
  %v156 = vunpack.c.l.b16 %v32
  %v157 = vunpack.c.l.b16 %v33
  %v158 = vunpack.c.l.b16 %v34
  %v159 = vunpack.c.l.b16 %v35
  %v160 = vunpack.c.l.b16 %v36
  %v161 = vunpack.c.l.b16 %v37
  %v162 = vunpack.c.l.b16 %v38
  %v163 = vunpack.c.l.b16 %v39
  %v164 = vunpack.c.l.b16 %v40
  %v165 = vunpack.c.l.b16 %v41
  %v166 = vunpack.c.l.b16 %v42
  %v167 = vunpack.c.l.b16 %v43
  %v168 = vunpack.c.l.b16 %v44
  %v169 = vunpack.c.l.b16 %v45
  %v170 = vunpack.c.l.b16 %v46
  %v171 = vunpack.c.l.b16 %v47
  %v172 = vpack.c.b16 %v157, %v156
  %v173 = vpack.c.b16 %v159, %v158
  %v174 = vpack.c.b16 %v161, %v160
  %v175 = vpack.c.b16 %v163, %v162
  %v176 = vpack.c.b16 %v165, %v164
  %v177 = vpack.c.b16 %v167, %v166
  %v178 = vpack.c.b16 %v169, %v168
  %v179 = vpack.c.b16 %v171, %v170
  %188 = vmatpush.bf16.msra.mxu0 %v179
  %189 = vmatpush.bf16.msra.mxu0 %v178
  %190 = vmatpush.bf16.msra.mxu0 %v177
  %191 = vmatpush.bf16.msra.mxu0 %v176
  %192 = vmatpush.bf16.msra.mxu0 %v175
  %193 = vmatpush.bf16.msra.mxu0 %v174
  %194 = vmatpush.bf16.msra.mxu0 %v173
  %195 = vmatpush.bf16.msra.mxu0 %v172
  %196 = vmatmul.bf16.gmra.mxu0 %v138
  %v197 = vpop.f32.mrf.mxu0
  %v198 = vadd.f32 %v139, %v197
  %v199 = vpop.f32.mrf.mxu0
  %v200 = vadd.f32 %v139, %v199
  %201 = vdwg.mxu0
  %v202 = vmax.f32 %v198, 0.0
  %v203 = vmax.f32 %v200, 0.0
  %v204 = vpack.c.bf16 %v203, %v202
  %v205 = vperm.slane %v66, 0
  %v222 = vunpack.c.l.b16 %v48
  %v223 = vunpack.c.l.b16 %v49
  %v224 = vunpack.c.l.b16 %v50
  %v225 = vunpack.c.l.b16 %v51
  %v226 = vunpack.c.l.b16 %v52
  %v227 = vunpack.c.l.b16 %v53
  %v228 = vunpack.c.l.b16 %v54
  %v229 = vunpack.c.l.b16 %v55
  %v230 = vunpack.c.l.b16 %v56
  %v231 = vunpack.c.l.b16 %v57
  %v232 = vunpack.c.l.b16 %v58
  %v233 = vunpack.c.l.b16 %v59
  %v234 = vunpack.c.l.b16 %v60
  %v235 = vunpack.c.l.b16 %v61
  %v236 = vunpack.c.l.b16 %v62
  %v237 = vunpack.c.l.b16 %v63
  %v238 = vpack.c.b16 %v223, %v222
  %v239 = vpack.c.b16 %v225, %v224
  %v240 = vpack.c.b16 %v227, %v226
  %v241 = vpack.c.b16 %v229, %v228
  %v242 = vpack.c.b16 %v231, %v230
  %v243 = vpack.c.b16 %v233, %v232
  %v244 = vpack.c.b16 %v235, %v234
  %v245 = vpack.c.b16 %v237, %v236
  %254 = vmatpush.bf16.msra.mxu0 %v245
  %255 = vmatpush.bf16.msra.mxu0 %v244
  %256 = vmatpush.bf16.msra.mxu0 %v243
  %257 = vmatpush.bf16.msra.mxu0 %v242
  %258 = vmatpush.bf16.msra.mxu0 %v241
  %259 = vmatpush.bf16.msra.mxu0 %v240
  %260 = vmatpush.bf16.msra.mxu0 %v239
  %261 = vmatpush.bf16.msra.mxu0 %v238
  %262 = vmatmul.bf16.gmra.mxu0 %v204
  %v263 = vpop.f32.mrf.mxu0
  %v264 = vadd.f32 %v205, %v263
  %v265 = vpop.f32.mrf.mxu0
  %v266 = vadd.f32 %v205, %v265
  %267 = vdwg.mxu0
  %268 = vst [vmem:[%s3] sm:$0xff] %v264
  %269 = vst [vmem:[%s3 + $0x8] sm:$0xff] %v266
  // Predicated region
  $region14: #{state_predictor_forward.1} parent=0 // pred_check
    _
  $region15: #{state_predictor_forward.1} parent=0 // pred_check_branch
    %271 = sbr.rel (0) target = $region17
  $region16: #{state_predictor_forward.1} parent=0 // pred_region
    _
  $region17: #{state_predictor_forward.1} parent=0 // pred_fallthru
    _
  // Predicated region
  $region18: #{state_predictor_forward.1} parent=0 // pred_check
    _
  $region19: #{state_predictor_forward.1} parent=0 // pred_check_branch
    %273 = sbr.rel (0) target = $region21
  $region20: #{state_predictor_forward.1} parent=0 // pred_region
    _
  $region21: #{state_predictor_forward.1} parent=0 // pred_fallthru
    _

</llo_original>
